<compile_context>
chip_gen: v7x
topology: tpu7x:2x2x1
jax: 0.10.0
libtpu: 0.0.40
codegen_flags: <defaults>
</compile_context>

<pallas_src>
import functools
import math

import jax
import jax.numpy as jnp
from jax.experimental import pallas as pl
from jax.experimental.pallas import tpu as pltpu


def _round_up(n, m):
    return ((n + m - 1) // m) * m


def _hash_bits(shape, seed_u32, row0_u32, salt):
    """Stateless per-element 32-bit hash (splitmix/murmur-style avalanche).

    Depends only on (seed, global row index, column index, salt), so the
    dropout mask realization does not change with the row-tile size.
    """
    r = jax.lax.broadcasted_iota(jnp.int32, shape, 0).astype(jnp.uint32) + row0_u32
    c = jax.lax.broadcasted_iota(jnp.int32, shape, 1).astype(jnp.uint32)
    x = (r * jnp.uint32(0x9E3779B1)) ^ (c * jnp.uint32(0x85EBCA77))
    x = x ^ seed_u32 ^ jnp.uint32(salt)
    x = x ^ (x >> jnp.uint32(16))
    x = x * jnp.uint32(0x7FEB352D)
    x = x ^ (x >> jnp.uint32(15))
    x = x * jnp.uint32(0x846CA68B)
    x = x ^ (x >> jnp.uint32(16))
    return x


def _prenet_kernel(seed_ref, x_ref, w1_ref, b1_ref, w2_ref, b2_ref, o_ref,
                   *, p, training, tm):
    # ---- layer 1: Linear (bf16 operands, f32 accum) -> ReLU -> Dropout ----
    h = jnp.dot(x_ref[...], w1_ref[...], preferred_element_type=jnp.float32)
    h = jnp.maximum(h + b1_ref[...], 0.0)

    if training and p > 0.0:
        seed = seed_ref[0].astype(jnp.uint32)
        row0 = (pl.program_id(0) * tm).astype(jnp.uint32)
        thresh = jnp.uint32(min(int(round(p * 4294967296.0)), 4294967295))
        scale = jnp.float32(1.0 / (1.0 - p))
        keep1 = _hash_bits(h.shape, seed, row0, 0x3C6EF372) >= thresh
        h = jnp.where(keep1, h, 0.0) * scale

    # ---- layer 2: Linear -> ReLU -> Dropout -------------------------------
    y = jnp.dot(h.astype(jnp.bfloat16), w2_ref[...],
                preferred_element_type=jnp.float32)
    y = jnp.maximum(y + b2_ref[...], 0.0)

    if training and p > 0.0:
        keep2 = _hash_bits(y.shape, seed, row0, 0x1B873593) >= thresh
        y = jnp.where(keep2, y, 0.0) * scale

    o_ref[...] = y.astype(o_ref.dtype)


def prenet_forward(x, params, *, dropout_rate=0.5, training=True, seed=0, tm=512):
    """Pallas Prenet forward.  x: (..., in_dim) -> (..., sizes[-1])."""
    w1, b1, w2, b2 = params["w1"], params["b1"], params["w2"], params["b2"]
    in_dim, h1 = w1.shape
    h2 = w2.shape[1]

    lead_shape = x.shape[:-1]
    n_rows = int(math.prod(lead_shape)) if lead_shape else 1
    # bf16 input rows -> halves x HBM traffic; matmul accumulates in f32.
    x2 = x.reshape(n_rows, in_dim).astype(jnp.bfloat16)

    # Big row tile for MXU utilization; cap to the (8-aligned) problem size.
    tm_eff = min(int(tm), _round_up(max(n_rows, 1), 8))
    grid = (pl.cdiv(n_rows, tm_eff),)   # partial last block handled by Pallas

    b1_2d = b1.reshape(1, h1).astype(jnp.float32)
    b2_2d = b2.reshape(1, h2).astype(jnp.float32)
    seed_arr = jnp.asarray([seed], dtype=jnp.int32)

    kernel = functools.partial(_prenet_kernel, p=float(dropout_rate),
                               training=bool(training), tm=tm_eff)

    # TODO(synk): output kept in f32 to match nn.Linear semantics; switch
    # o_ref dtype to bf16 if the downstream consumer accepts it.
    out = pl.pallas_call(
        kernel,
        out_shape=jax.ShapeDtypeStruct((n_rows, h2), jnp.float32),
        grid_spec=pltpu.PrefetchScalarGridSpec(
            num_scalar_prefetch=1,
            grid=grid,
            in_specs=[
                pl.BlockSpec((tm_eff, in_dim), lambda i, s: (i, 0)),   # x tile
                pl.BlockSpec((in_dim, h1),     lambda i, s: (0, 0)),   # W1
                pl.BlockSpec((1, h1),          lambda i, s: (0, 0)),   # b1
                pl.BlockSpec((h1, h2),         lambda i, s: (0, 0)),   # W2
                pl.BlockSpec((1, h2),          lambda i, s: (0, 0)),   # b2
            ],
            out_specs=pl.BlockSpec((tm_eff, h2), lambda i, s: (i, 0)),
        ),
        compiler_params=pltpu.CompilerParams(
            # Dropout mask is a stateless hash of the global row/col index,
            # so grid steps are order-independent -> safe to shard across
            # both TensorCores on v7x.
            dimension_semantics=("parallel",)),
    )(seed_arr, x2,
      w1.astype(jnp.bfloat16), b1_2d,
      w2.astype(jnp.bfloat16), b2_2d)

    return out.reshape(*lead_shape, h2)


def init_prenet_params(key, in_dim, sizes=(256, 128)):
    """Deterministic init matching nn.Linear default U(-1/sqrt(fan_in), 1/sqrt(fan_in))."""
    in_sizes = [in_dim] + list(sizes[:-1])
    params = {}
    names = ["1", "2"]
    for name, fi, fo in zip(names, in_sizes, sizes):
        key, kw, kb = jax.random.split(key, 3)
        bound = 1.0 / math.sqrt(fi)
        params[f"w{name}"] = jax.random.uniform(kw, (fi, fo), jnp.float32,
                                                -bound, bound)
        params[f"b{name}"] = jax.random.uniform(kb, (fo,), jnp.float32,
                                                -bound, bound)
    return params


if __name__ == "__main__":
    key = jax.random.PRNGKey(0)
    k_param, k_x = jax.random.split(key)

    B, T, IN_DIM = 2, 8, 32
    SIZES = (256, 128)
    params = init_prenet_params(k_param, IN_DIM, SIZES)
    x = jax.random.normal(k_x, (B, T, IN_DIM), jnp.float32)

    # --- eval-mode (dropout = identity) -------------------------------------
    y_eval = jax.block_until_ready(
        prenet_forward(x, params, dropout_rate=0.5, training=False))
    assert y_eval.shape == (B, T, SIZES[-1])

    # Reference with the same dtype pipeline (bf16 operands, f32 accumulation).
    xb = x.reshape(-1, IN_DIM).astype(jnp.bfloat16)
    w1b = params["w1"].astype(jnp.bfloat16)
    w2b = params["w2"].astype(jnp.bfloat16)
    h_ref = jnp.maximum(
        jnp.dot(xb, w1b, preferred_element_type=jnp.float32) + params["b1"], 0.0)
    y_ref = jnp.maximum(
        jnp.dot(h_ref.astype(jnp.bfloat16), w2b,
                preferred_element_type=jnp.float32) + params["b2"], 0.0)
    y_ref = y_ref.reshape(B, T, SIZES[-1])
    assert jnp.allclose(y_eval, y_ref, atol=1e-2, rtol=1e-2), \
        "eval-mode mismatch vs bf16-matched reference"

    # Loose check against the full-f32 reference (PyTorch semantics).
    h32 = jnp.maximum(x @ params["w1"] + params["b1"], 0.0)
    y32 = jnp.maximum(h32 @ params["w2"] + params["b2"], 0.0)
    assert jnp.allclose(y_eval, y32, atol=1e-1, rtol=1e-1), \
        "eval-mode mismatch vs f32 reference"

    # --- training-mode (dropout active) -------------------------------------
    # TODO(synk): dropout mask uses a stateless in-kernel hash PRNG, so it will
    # not bit-match torch's RNG stream (semantics — drop prob p, scale 1/(1-p)
    # — are identical).
    y_train = jax.block_until_ready(
        prenet_forward(x, params, dropout_rate=0.5, training=True, seed=42))
    assert y_train.shape == (B, T, SIZES[-1])
    assert bool(jnp.all(jnp.isfinite(y_train)))
    assert bool(jnp.all(y_train >= 0.0))
    zero_frac = float(jnp.mean((y_train == 0.0).astype(jnp.float32)))
    assert zero_frac > 0.3, f"dropout appears inactive (zero fraction={zero_frac})"

    print("KERNEL_OK")
</pallas_src>

<mosaic_0001>
module attributes {stable_mosaic.version = 11 : i64} {
  func.func @_prenet_kernel(%arg0: i32, %arg1: memref<1xi32, #tpu.memory_space<smem>>, %arg2: memref<16x32xbf16, #tpu.memory_space<vmem>>, %arg3: memref<32x256xbf16, #tpu.memory_space<vmem>>, %arg4: memref<1x256xf32, #tpu.memory_space<vmem>>, %arg5: memref<256x128xbf16, #tpu.memory_space<vmem>>, %arg6: memref<1x128xf32, #tpu.memory_space<vmem>>, %arg7: memref<16x128xf32, #tpu.memory_space<vmem>>) attributes {dimension_semantics = [#tpu.dimension_semantics<parallel>], iteration_bounds = array<i64: 1>, scalar_prefetch = 1 : i64, scratch_operands = 0 : i64, tpu.core_type = #tpu.core_type<tc>, window_params = [{transform_indices = @transform_0, window_bounds = array<i64: 16, 32>}, {pipeline_mode = #tpu.pipeline_mode<synchronous>, transform_indices = @transform_1, window_bounds = array<i64: 32, 256>}, {pipeline_mode = #tpu.pipeline_mode<synchronous>, transform_indices = @transform_2, window_bounds = array<i64: 1, 256>}, {pipeline_mode = #tpu.pipeline_mode<synchronous>, transform_indices = @transform_3, window_bounds = array<i64: 256, 128>}, {pipeline_mode = #tpu.pipeline_mode<synchronous>, transform_indices = @transform_4, window_bounds = array<i64: 1, 128>}, {transform_indices = @transform_5, window_bounds = array<i64: 16, 128>}]} {
    %c0 = arith.constant 0 : index
    %c0_0 = arith.constant 0 : index
    %0 = vector.load %arg2[%c0, %c0_0] : memref<16x32xbf16, #tpu.memory_space<vmem>>, vector<16x32xbf16>
    %c0_1 = arith.constant 0 : index
    %c0_2 = arith.constant 0 : index
    %1 = vector.load %arg3[%c0_1, %c0_2] : memref<32x256xbf16, #tpu.memory_space<vmem>>, vector<32x256xbf16>
    %cst = arith.constant dense<0.000000e+00> : vector<16x256xf32>
    %2 = tpu.matmul %0, %1, %cst {dimension_numbers = #tpu.dot_dimension_numbers<[1], [0], [0], [1], [0, 0, 1, 1], [], []>} : vector<16x32xbf16>, vector<32x256xbf16>, vector<16x256xf32> -> vector<16x256xf32>
    %c0_3 = arith.constant 0 : index
    %c0_4 = arith.constant 0 : index
    %3 = vector.load %arg4[%c0_3, %c0_4] : memref<1x256xf32, #tpu.memory_space<vmem>>, vector<1x256xf32>
    %4 = vector.broadcast %3 : vector<1x256xf32> to vector<16x256xf32>
    %5 = arith.addf %2, %4 : vector<16x256xf32>
    %cst_5 = arith.constant 0.000000e+00 : f32
    %6 = vector.broadcast %cst_5 : f32 to vector<16x256xf32>
    %7 = arith.maximumf %5, %6 : vector<16x256xf32>
    %8 = arith.truncf %7 : vector<16x256xf32> to vector<16x256xbf16>
    %c0_6 = arith.constant 0 : index
    %c0_7 = arith.constant 0 : index
    %9 = vector.load %arg5[%c0_6, %c0_7] : memref<256x128xbf16, #tpu.memory_space<vmem>>, vector<256x128xbf16>
    %cst_8 = arith.constant dense<0.000000e+00> : vector<16x128xf32>
    %10 = tpu.matmul %8, %9, %cst_8 {dimension_numbers = #tpu.dot_dimension_numbers<[1], [0], [0], [1], [0, 0, 1, 1], [], []>} : vector<16x256xbf16>, vector<256x128xbf16>, vector<16x128xf32> -> vector<16x128xf32>
    %c0_9 = arith.constant 0 : index
    %c0_10 = arith.constant 0 : index
    %11 = vector.load %arg6[%c0_9, %c0_10] : memref<1x128xf32, #tpu.memory_space<vmem>>, vector<1x128xf32>
    %12 = vector.broadcast %11 : vector<1x128xf32> to vector<16x128xf32>
    %13 = arith.addf %10, %12 : vector<16x128xf32>
    %cst_11 = arith.constant 0.000000e+00 : f32
    %14 = vector.broadcast %cst_11 : f32 to vector<16x128xf32>
    %15 = arith.maximumf %13, %14 : vector<16x128xf32>
    %c0_12 = arith.constant 0 : index
    %c0_13 = arith.constant 0 : index
    %16 = vector.load %arg7[%c0_12, %c0_13] : memref<16x128xf32, #tpu.memory_space<vmem>>, vector<16x128xf32>
    tpu.vector_store %arg7[%c0_12, %c0_13], %15 {strides = array<i32>} : memref<16x128xf32, #tpu.memory_space<vmem>>, vector<16x128xf32>,
    return
  }
  func.func @transform_0(%arg0: i32, %arg1: memref<1xi32, #tpu.memory_space<smem>>) -> (i32, i32) {
    %c0_i32 = arith.constant 0 : i32
    %c0_i32_0 = arith.constant 0 : i32
    return %arg0, %c0_i32 : i32, i32
  }
  func.func @transform_1(%arg0: i32, %arg1: memref<1xi32, #tpu.memory_space<smem>>) -> (i32, i32) {
    %c0_i32 = arith.constant 0 : i32
    %c0_i32_0 = arith.constant 0 : i32
    %c0_i32_1 = arith.constant 0 : i32
    return %c0_i32, %c0_i32_0 : i32, i32
  }
  func.func @transform_2(%arg0: i32, %arg1: memref<1xi32, #tpu.memory_space<smem>>) -> (i32, i32) {
    %c0_i32 = arith.constant 0 : i32
    %c0_i32_0 = arith.constant 0 : i32
    %c0_i32_1 = arith.constant 0 : i32
    return %c0_i32, %c0_i32_0 : i32, i32
  }
  func.func @transform_3(%arg0: i32, %arg1: memref<1xi32, #tpu.memory_space<smem>>) -> (i32, i32) {
    %c0_i32 = arith.constant 0 : i32
    %c0_i32_0 = arith.constant 0 : i32
    %c0_i32_1 = arith.constant 0 : i32
    return %c0_i32, %c0_i32_0 : i32, i32
  }
  func.func @transform_4(%arg0: i32, %arg1: memref<1xi32, #tpu.memory_space<smem>>) -> (i32, i32) {
    %c0_i32 = arith.constant 0 : i32
    %c0_i32_0 = arith.constant 0 : i32
    %c0_i32_1 = arith.constant 0 : i32
    return %c0_i32, %c0_i32_0 : i32, i32
  }
  func.func @transform_5(%arg0: i32, %arg1: memref<1xi32, #tpu.memory_space<smem>>) -> (i32, i32) {
    %c0_i32 = arith.constant 0 : i32
    %c0_i32_0 = arith.constant 0 : i32
    return %arg0, %c0_i32 : i32, i32
  }
}

</mosaic_0001>

<llo_original>
// kernel: tpu_custom_call.1
$region0: #{tpu_custom_call.1}
  #allocation0 [shape = 'u32[]', space=smem, size = 0x4, offset = 0x4, fixed_abs, tag = 'smem constant byte address 0x4 - core index']
  #allocation1 [shape = 'u32[144,128]{1,0:T(1,128)}', space=vmem, size = 0x12000, scoped, tag = 'internal scratch']
  #allocation2 [shape = 's32[1]{0}', space=sflag, size = 0x4, scoped, tag = 'scoped memory for tpu_custom_call.1']
  #allocation3 [shape = 's32[1]{0:T(128)S(6)}', space=smem, size = 0x200, scoped, tag = 'prefetched SMEM operand 0']
  %s0 = inlined_call_operand.<no memory space> [shape: s32[1], index: 0, kind: input, shape index: {}]
  %s1 = inlined_call_operand.hbm [shape: bf16[16,32], index: 1, kind: input, shape index: {}]
  %s2 = inlined_call_operand.hbm [shape: bf16[32,256], index: 2, kind: input, shape index: {}]
  %s3 = inlined_call_operand.vmem [shape: f32[1,256], index: 3, kind: input, shape index: {}]
  %s4 = inlined_call_operand.hbm [shape: bf16[256,128], index: 4, kind: input, shape index: {}]
  %s5 = inlined_call_operand.vmem [shape: f32[1,128], index: 5, kind: input, shape index: {}]
  %s6 = inlined_call_operand.hbm [shape: f32[16,128], index: 6, kind: output, shape index: {}]
  %s7 = sld [smem:[#allocation0]]
  $region42: #{tpu_custom_call.1} parent=0
    _
  %s9 = ssub.s32 1, %s7
  %s10 = scalar_select 0, %s9, %s7
  %11 = sst [smem:[#allocation3]] %s0
  $region1: #{tpu_custom_call.1} parent=0
    #allocation4 [shape = 'u8[4096]{0}', space=vmem, size = 0x1000, scoped, tag = 'input window, operand 1, single buffered']
    #allocation5 [shape = 's32[1]{0}', space=sflag, size = 0x4, scoped, tag = 'scoped memory for tpu_custom_call.1']
    #allocation6 [shape = 's32[1]{0}', space=sflag, size = 0x4, scoped, tag = 'scoped memory for tpu_custom_call.1']
    #allocation7 [shape = 'u8[16384]{0}', space=vmem, size = 0x4000, scoped, tag = 'input window, operand 2, single buffered']
    #allocation8 [shape = 's32[1]{0}', space=sflag, size = 0x4, scoped, tag = 'scoped memory for tpu_custom_call.1']
    #allocation9 [shape = 'u8[65536]{0}', space=vmem, size = 0x10000, scoped, tag = 'input window, operand 4, single buffered']
    #allocation10 [shape = 'u8[8192]{0}', space=vmem, size = 0x2000, scoped, tag = 'output window, operand 0, single buffered']
    %12 = vsyncpa [#allocation5], 0
    %13 = vsyncpa [#allocation8], 0
    %14 = vsyncpa [#allocation6], 0
    // Predicated region
    $region2: #{tpu_custom_call.1} parent=1 // pred_check
      _
    $region3: #{tpu_custom_call.1} parent=1 // pred_check_branch
      %16 = sbr.rel (0) target = $region5
    $region4: #{tpu_custom_call.1} parent=1 // pred_region
      %s18 = ssub.s32 128, 128
      %19 = vsyncadd [#allocation5], %s18
      %s20 = sshll.u32 [#allocation4], 4
      %s21 = int_to_ptr.vmem [resolvable:$true] %s20
      %26 = dma.hbm_to_vmem [thread:$0]  %s1, 128, %s21, [#allocation5], 64, 64, 4
    $region5: #{tpu_custom_call.1} parent=1 // pred_fallthru
      _
    // Predicated region
    $region6: #{tpu_custom_call.1} parent=1 // pred_check
      _
    $region7: #{tpu_custom_call.1} parent=1 // pred_check_branch
      %28 = sbr.rel (0) target = $region9
    $region8: #{tpu_custom_call.1} parent=1 // pred_region
      %s30 = ssub.s32 512, 512
      %31 = vsyncadd [#allocation8], %s30
      %s32 = sshll.u32 [#allocation7], 4
      %s33 = int_to_ptr.vmem [resolvable:$true] %s32
      %38 = dma.hbm_to_vmem [thread:$0]  %s2, 512, %s33, [#allocation8], 128, 128, 8
    $region9: #{tpu_custom_call.1} parent=1 // pred_fallthru
      _
    // Predicated region
    $region10: #{tpu_custom_call.1} parent=1 // pred_check
      _
    $region11: #{tpu_custom_call.1} parent=1 // pred_check_branch
      %40 = sbr.rel (0) target = $region13
    $region12: #{tpu_custom_call.1} parent=1 // pred_region
      _
    $region13: #{tpu_custom_call.1} parent=1 // pred_fallthru
      _
    // Predicated region
    $region14: #{tpu_custom_call.1} parent=1 // pred_check
      _
    $region15: #{tpu_custom_call.1} parent=1 // pred_check_branch
      %42 = sbr.rel (0) target = $region17
    $region16: #{tpu_custom_call.1} parent=1 // pred_region
      %s44 = ssub.s32 2048, 2048
      %45 = vsyncadd [#allocation8], %s44
      %s46 = sshll.u32 [#allocation9], 4
      %s47 = int_to_ptr.vmem [resolvable:$true] %s46
      %52 = dma.hbm_to_vmem [thread:$0]  %s4, 2048, %s47, [#allocation8], 64, 64, 4
    $region17: #{tpu_custom_call.1} parent=1 // pred_fallthru
      _
    // Predicated region
    $region18: #{tpu_custom_call.1} parent=1 // pred_check
      _
    $region19: #{tpu_custom_call.1} parent=1 // pred_check_branch
      %54 = sbr.rel (0) target = $region21
    $region20: #{tpu_custom_call.1} parent=1 // pred_region
      _
    $region21: #{tpu_custom_call.1} parent=1 // pred_fallthru
      _
    // Predicated region
    $region22: #{tpu_custom_call.1} parent=1 // pred_check
      _
    $region23: #{tpu_custom_call.1} parent=1 // pred_check_branch
      %56 = sbr.rel (0) target = $region25
    $region24: #{tpu_custom_call.1} parent=1 // pred_region
      %57 = dma.done [#allocation5], 128
    $region25: #{tpu_custom_call.1} parent=1 // pred_fallthru
      _
    // Predicated region
    $region26: #{tpu_custom_call.1} parent=1 // pred_check
      _
    $region27: #{tpu_custom_call.1} parent=1 // pred_check_branch
      %59 = sbr.rel (0) target = $region29
    $region28: #{tpu_custom_call.1} parent=1 // pred_region
      %60 = dma.done [#allocation8], 512
    $region29: #{tpu_custom_call.1} parent=1 // pred_fallthru
      _
    // Predicated region
    $region30: #{tpu_custom_call.1} parent=1 // pred_check
      _
    $region31: #{tpu_custom_call.1} parent=1 // pred_check_branch
      %62 = sbr.rel (0) target = $region33
    $region32: #{tpu_custom_call.1} parent=1 // pred_region
      %63 = dma.done [#allocation8], 2048
    $region33: #{tpu_custom_call.1} parent=1 // pred_fallthru
      _
    %v65 = vld [vmem:[#allocation4] sm:$0xf]
    %v66 = vld [vmem:[#allocation4 + $0x4] sm:$0xf]
    %v67 = vld [vmem:[#allocation7] sm:$0xff]
    %v68 = vld [vmem:[#allocation7 + $0x8] sm:$0xff]
    %v69 = vld [vmem:[#allocation7 + $0x10] sm:$0xff]
    %v70 = vld [vmem:[#allocation7 + $0x18] sm:$0xff]
    %v71 = vld [vmem:[%s3] sm:$0x3]
    %v73 = vlaneseq
    %v74 = vshrl.u32 %v73, 7
    %v75 = vsub.s32 0, %v74
    %v76 = vrot.slane %v71, %v75
    %v77 = vlaneseq
    %v78 = vshrl.u32 %v77, 7
    %v79 = vsub.s32 1, %v78
    %v80 = vrot.slane %v71, %v79
    %v85 = vunpack.c.l.b16 %v65
    %v86 = vunpack.c.l.b16 %v66
    %v87 = vpack.c.b16 %v86, %v85
    %v92 = vunpack.c.l.b16 %v67
    %v93 = vunpack.c.h.b16 %v67
    %v94 = vunpack.c.l.b16 %v68
    %v95 = vunpack.c.h.b16 %v68
    %v96 = vunpack.c.l.b16 %v69
    %v97 = vunpack.c.h.b16 %v69
    %v98 = vunpack.c.l.b16 %v70
    %v99 = vunpack.c.h.b16 %v70
    %v100 = vpack.c.b16 %v94, %v92
    %v101 = vpack.c.b16 %v95, %v93
    %v102 = vpack.c.b16 %v98, %v96
    %v103 = vpack.c.b16 %v99, %v97
    %vm108 = vcmask 261120
    %v110 = vsel %vm108, %v87, 0
    %112 = vmatprep.subr.bf16.mxu0 %v101
    %113 = vmatpush1.bf16.msra.mxu0 %v100
    %114 = vmatprep.subr.bf16.mxu0 %v103
    %115 = vmatpush1.bf16.msra.mxu0 %v102
    %116 = vmatprep.subr.bf16.mxu0 0
    %117 = vmatpush1.bf16.msra.mxu0 0
    %118 = vmatprep.subr.bf16.mxu0 0
    %119 = vmatpush1.bf16.msra.mxu0 0
    %120 = vmatprep.subr.bf16.mxu0 0
    %121 = vmatpush1.bf16.msra.mxu0 0
    %122 = vmatprep.subr.bf16.mxu0 0
    %123 = vmatpush1.bf16.msra.mxu0 0
    %124 = vmatprep.subr.bf16.mxu0 0
    %125 = vmatpush1.bf16.msra.mxu0 0
    %126 = vmatprep.subr.bf16.mxu0 0
    %127 = vmatpush1.bf16.msra.mxu0 0
    %128 = vmatprep.subr.bf16.mxu0 0
    %129 = vmatpush1.bf16.msra.mxu0 0
    %130 = vmatprep.subr.bf16.mxu0 0
    %131 = vmatpush1.bf16.msra.mxu0 0
    %132 = vmatprep.subr.bf16.mxu0 0
    %133 = vmatpush1.bf16.msra.mxu0 0
    %134 = vmatprep.subr.bf16.mxu0 0
    %135 = vmatpush1.bf16.msra.mxu0 0
    %136 = vmatprep.subr.bf16.mxu0 0
    %137 = vmatpush1.bf16.msra.mxu0 0
    %138 = vmatprep.subr.bf16.mxu0 0
    %139 = vmatpush1.bf16.msra.mxu0 0
    %140 = vmatprep.subr.bf16.mxu0 0
    %141 = vmatpush1.bf16.msra.mxu0 0
    %142 = vmatprep.subr.bf16.mxu0 0
    %143 = vmatpush1.bf16.msra.mxu0 0
    %144 = vmatprep.mubr.bf16.mxu0 0
    %145 = vmatmul.mubr.bf16.gmra.mrb[0].mxu0 %v110
    %v146 = vpop.f32.mrb[0].mxu0
    %v147 = vadd.f32 %v76, %v146
    %v148 = vpop.f32.mrb[0].mxu0
    %v149 = vadd.f32 %v80, %v148
    %v150 = vpop.f32.mrb[0].mxu0
    %v151 = vadd.f32 %v76, %v150
    %v152 = vpop.f32.mrb[0].mxu0
    %v153 = vadd.f32 %v80, %v152
    %154 = vdwg.mxu0
    %v155 = vmax.f32 %v147, 0.0
    %v156 = vmax.f32 %v149, 0.0
    %v157 = vmax.f32 %v151, 0.0
    %v158 = vmax.f32 %v153, 0.0
    %v159 = vpack.c.bf16 %v157, %v155
    %v160 = vpack.c.bf16 %v158, %v156
    %v161 = vld [vmem:[#allocation9] sm:$0xf]
    %v162 = vld [vmem:[#allocation9 + $0x4] sm:$0xf]
    %v163 = vld [vmem:[#allocation9 + $0x8] sm:$0xf]
    %v164 = vld [vmem:[#allocation9 + $0xc] sm:$0xf]
    %v165 = vld [vmem:[#allocation9 + $0x10] sm:$0xf]
    %v166 = vld [vmem:[#allocation9 + $0x14] sm:$0xf]
    %v167 = vld [vmem:[#allocation9 + $0x18] sm:$0xf]
    %v168 = vld [vmem:[#allocation9 + $0x1c] sm:$0xf]
    %v169 = vld [vmem:[#allocation9 + $0x20] sm:$0xf]
    %v170 = vld [vmem:[#allocation9 + $0x24] sm:$0xf]
    %v171 = vld [vmem:[#allocation9 + $0x28] sm:$0xf]
    %v172 = vld [vmem:[#allocation9 + $0x2c] sm:$0xf]
    %v173 = vld [vmem:[#allocation9 + $0x30] sm:$0xf]
    %v174 = vld [vmem:[#allocation9 + $0x34] sm:$0xf]
    %v175 = vld [vmem:[#allocation9 + $0x38] sm:$0xf]
    %v176 = vld [vmem:[#allocation9 + $0x3c] sm:$0xf]
    %v177 = vld [vmem:[#allocation9 + $0x40] sm:$0xf]
    %v178 = vld [vmem:[#allocation9 + $0x44] sm:$0xf]
    %v179 = vld [vmem:[#allocation9 + $0x48] sm:$0xf]
    %v180 = vld [vmem:[#allocation9 + $0x4c] sm:$0xf]
    %v181 = vld [vmem:[#allocation9 + $0x50] sm:$0xf]
    %v182 = vld [vmem:[#allocation9 + $0x54] sm:$0xf]
    %v183 = vld [vmem:[#allocation9 + $0x58] sm:$0xf]
    %v184 = vld [vmem:[#allocation9 + $0x5c] sm:$0xf]
    %v185 = vld [vmem:[#allocation9 + $0x60] sm:$0xf]
    %v186 = vld [vmem:[#allocation9 + $0x64] sm:$0xf]
    %v187 = vld [vmem:[#allocation9 + $0x68] sm:$0xf]
    %v188 = vld [vmem:[#allocation9 + $0x6c] sm:$0xf]
    %v189 = vld [vmem:[#allocation9 + $0x70] sm:$0xf]
    %v190 = vld [vmem:[#allocation9 + $0x74] sm:$0xf]
    %v191 = vld [vmem:[#allocation9 + $0x78] sm:$0xf]
    %v192 = vld [vmem:[#allocation9 + $0x7c] sm:$0xf]
    %v193 = vld [vmem:[%s5] sm:$0x1]
    %v195 = vlaneseq
    %v196 = vshrl.u32 %v195, 7
    %v197 = vsub.s32 0, %v196
    %v198 = vrot.slane %v193, %v197
    %v232 = vunpack.c.l.b16 %v161
    %v233 = vunpack.c.l.b16 %v162
    %v234 = vunpack.c.l.b16 %v163
    %v235 = vunpack.c.l.b16 %v164
    %v236 = vunpack.c.l.b16 %v165
    %v237 = vunpack.c.l.b16 %v166
    %v238 = vunpack.c.l.b16 %v167
    %v239 = vunpack.c.l.b16 %v168
    %v240 = vunpack.c.l.b16 %v169
    %v241 = vunpack.c.l.b16 %v170
    %v242 = vunpack.c.l.b16 %v171
    %v243 = vunpack.c.l.b16 %v172
    %v244 = vunpack.c.l.b16 %v173
    %v245 = vunpack.c.l.b16 %v174
    %v246 = vunpack.c.l.b16 %v175
    %v247 = vunpack.c.l.b16 %v176
    %v248 = vunpack.c.l.b16 %v177
    %v249 = vunpack.c.l.b16 %v178
    %v250 = vunpack.c.l.b16 %v179
    %v251 = vunpack.c.l.b16 %v180
    %v252 = vunpack.c.l.b16 %v181
    %v253 = vunpack.c.l.b16 %v182
    %v254 = vunpack.c.l.b16 %v183
    %v255 = vunpack.c.l.b16 %v184
    %v256 = vunpack.c.l.b16 %v185
    %v257 = vunpack.c.l.b16 %v186
    %v258 = vunpack.c.l.b16 %v187
    %v259 = vunpack.c.l.b16 %v188
    %v260 = vunpack.c.l.b16 %v189
    %v261 = vunpack.c.l.b16 %v190
    %v262 = vunpack.c.l.b16 %v191
    %v263 = vunpack.c.l.b16 %v192
    %v264 = vpack.c.b16 %v233, %v232
    %v265 = vpack.c.b16 %v235, %v234
    %v266 = vpack.c.b16 %v237, %v236
    %v267 = vpack.c.b16 %v239, %v238
    %v268 = vpack.c.b16 %v241, %v240
    %v269 = vpack.c.b16 %v243, %v242
    %v270 = vpack.c.b16 %v245, %v244
    %v271 = vpack.c.b16 %v247, %v246
    %v272 = vpack.c.b16 %v249, %v248
    %v273 = vpack.c.b16 %v251, %v250
    %v274 = vpack.c.b16 %v253, %v252
    %v275 = vpack.c.b16 %v255, %v254
    %v276 = vpack.c.b16 %v257, %v256
    %v277 = vpack.c.b16 %v259, %v258
    %v278 = vpack.c.b16 %v261, %v260
    %v279 = vpack.c.b16 %v263, %v262
    %296 = vmatprep.subr.bf16.mxu0 0
    %297 = vmatpush1.bf16.msra.mxu0 %v264
    %298 = vmatprep.subr.bf16.mxu0 0
    %299 = vmatpush1.bf16.msra.mxu0 %v265
    %300 = vmatprep.subr.bf16.mxu0 0
    %301 = vmatpush1.bf16.msra.mxu0 %v266
    %302 = vmatprep.subr.bf16.mxu0 0
    %303 = vmatpush1.bf16.msra.mxu0 %v267
    %304 = vmatprep.subr.bf16.mxu0 0
    %305 = vmatpush1.bf16.msra.mxu0 %v268
    %306 = vmatprep.subr.bf16.mxu0 0
    %307 = vmatpush1.bf16.msra.mxu0 %v269
    %308 = vmatprep.subr.bf16.mxu0 0
    %309 = vmatpush1.bf16.msra.mxu0 %v270
    %310 = vmatprep.subr.bf16.mxu0 0
    %311 = vmatpush1.bf16.msra.mxu0 %v271
    %312 = vmatprep.subr.bf16.mxu0 0
    %313 = vmatpush1.bf16.msra.mxu0 %v272
    %314 = vmatprep.subr.bf16.mxu0 0
    %315 = vmatpush1.bf16.msra.mxu0 %v273
    %316 = vmatprep.subr.bf16.mxu0 0
    %317 = vmatpush1.bf16.msra.mxu0 %v274
    %318 = vmatprep.subr.bf16.mxu0 0
    %319 = vmatpush1.bf16.msra.mxu0 %v275
    %320 = vmatprep.subr.bf16.mxu0 0
    %321 = vmatpush1.bf16.msra.mxu0 %v276
    %322 = vmatprep.subr.bf16.mxu0 0
    %323 = vmatpush1.bf16.msra.mxu0 %v277
    %324 = vmatprep.subr.bf16.mxu0 0
    %325 = vmatpush1.bf16.msra.mxu0 %v278
    %326 = vmatprep.subr.bf16.mxu0 0
    %327 = vmatpush1.bf16.msra.mxu0 %v279
    %328 = vmatprep.mubr.bf16.mxu0 %v160
    %329 = vmatmul.mubr.bf16.gmra.mrb[0].mxu0 %v159
    %v330 = vpop.f32.mrb[0].mxu0
    %v331 = vadd.f32 %v198, %v330
    %v332 = vpop.f32.mrb[0].mxu0
    %v333 = vpop.f32.mrb[0].mxu0
    %v334 = vadd.f32 %v198, %v333
    %v335 = vpop.f32.mrb[0].mxu0
    %336 = vdwg.mxu0
    %v337 = vmax.f32 %v331, 0.0
    %v338 = vmax.f32 %v334, 0.0
    %339 = vst [vmem:[#allocation10] sm:$0xff] %v337
    %340 = vst [vmem:[#allocation10 + $0x8] sm:$0xff] %v338
    // Predicated region
    $region34: #{tpu_custom_call.1} parent=1 // pred_check
      _
    $region35: #{tpu_custom_call.1} parent=1 // pred_check_branch
      %342 = sbr.rel (0) target = $region37
    $region36: #{tpu_custom_call.1} parent=1 // pred_region
      %s344 = ssub.s32 256, 256
      %345 = vsyncadd [#allocation6], %s344
      %s346 = sshll.u32 [#allocation10], 4
      %s347 = int_to_ptr.vmem [resolvable:$true] %s346
      %352 = dma.vmem_to_hbm [thread:$0]  %s347, 256, %s6, [#allocation6], 128, 128, 8
    $region37: #{tpu_custom_call.1} parent=1 // pred_fallthru
      _
    // Predicated region
    $region38: #{tpu_custom_call.1} parent=1 // pred_check
      _
    $region39: #{tpu_custom_call.1} parent=1 // pred_check_branch
      %354 = sbr.rel (0) target = $region41
    $region40: #{tpu_custom_call.1} parent=1 // pred_region
      %355 = dma.done [#allocation6], 256
    $region41: #{tpu_custom_call.1} parent=1 // pred_fallthru
      _
    %356 = vsyncpa [#allocation5], 1
    %357 = vsyncpa [#allocation8], 1
    %358 = vsyncpa [#allocation6], 1

</llo_original>
